<compile_context>
chip_gen: v6e
topology: v6e:2x2x1
jax: 0.10.0
libtpu: 0.0.40
codegen_flags: <defaults>
</compile_context>

<pallas_src>
import math

import jax
import jax.numpy as jnp
from jax.experimental import pallas as pl
from jax.experimental.pallas import tpu as pltpu

_LANES = 128
_ROW_ALIGN = 32  # int8 min tile is (32, 128)


def _cdiv(a, b):
    return -(-a // b)


# ---------------------------------------------------------------------------
# no-grad auxiliary: exact separable Euclidean distance transform (scipy semantics)
# ---------------------------------------------------------------------------
def _edt_first_axis(mask, axis):
    """1-D distance (in voxels) to the nearest zero of `mask` along `axis`;
    +inf for lines that contain no zero."""
    m = jnp.moveaxis(mask, axis, -1)
    L = m.shape[-1]
    idx = jnp.arange(L, dtype=jnp.float32)
    absdiff = jnp.abs(idx[:, None] - idx[None, :])          # (L_out, L_src)
    cand = jnp.where(m[..., None, :], jnp.inf, absdiff)     # only background sources
    d = jnp.min(cand, axis=-1)
    return jnp.moveaxis(d, -1, axis)


def _edt_combine_axis(fsq, axis):
    """out[i] = min_j fsq[j] + (i-j)^2 along `axis` (exact separable EDT step)."""
    f = jnp.moveaxis(fsq, axis, -1)
    L = f.shape[-1]
    idx = jnp.arange(L, dtype=jnp.float32)
    sq = (idx[:, None] - idx[None, :]) ** 2                 # (L_out, L_src)
    out = jnp.min(f[..., None, :] + sq, axis=-1)
    return jnp.moveaxis(out, -1, axis)


def _edt_nearest_zero(mask):
    """Distance from every voxel to the nearest zero voxel of `mask`
    (== scipy.ndimage.distance_transform_edt with unit sampling), exact."""
    # TODO(synk): for very large volumes replace the O(L^2) per-line envelope with
    # the Felzenszwalb-Huttenlocher O(L) lower-envelope scan (result is identical).
    d0 = _edt_first_axis(mask, 0)
    fsq = d0 * d0
    for a in range(1, mask.ndim):
        fsq = _edt_combine_axis(fsq, a)
    dist = jnp.sqrt(fsq)
    has_bg = jnp.any(jnp.logical_not(mask))
    # TODO(synk): scipy's behaviour when `mask` has no zero voxels is degenerate;
    # define the distance as 0 in that case.
    return jnp.where(has_bg, dist, 0.0)


def _compute_edts_forhdloss(posmask):
    """res[b] = edt(posmask[b]) + edt(~posmask[b]) — same as the torch helper."""
    def per_item(m):
        return _edt_nearest_zero(m) + _edt_nearest_zero(jnp.logical_not(m))
    return jax.vmap(per_item)(posmask)


# ---------------------------------------------------------------------------
# Pallas kernel + wrapper
# ---------------------------------------------------------------------------
def bhd_loss(output, target, *, block_rows=4096):
    """Forward pass of BHDLoss. output: (B, C, X, Y, Z); target: (B, X, Y, Z)."""
    B = output.shape[0]
    n = math.prod(output.shape[2:])

    pc = output[:, 0, ...].astype(jnp.float32)                       # (B, X, Y, Z)
    gt_f = target.astype(jnp.float32)

    # no-grad distance maps (torch computes these with scipy under no_grad)
    pc_dist = jax.lax.stop_gradient(_compute_edts_forhdloss(pc > 0.5))
    gt_dist = jax.lax.stop_gradient(_compute_edts_forhdloss(gt_f > 0.5))

    # ----- lane-dense layout: (B, rows_p, 128); rows_p is a multiple of 32 so the
    # int8 target stream tiles legally.  Reshape is free when n % 4096 == 0;
    # otherwise a single pad copy per array (tail is masked in-kernel regardless).
    rows_p = _cdiv(n, _ROW_ALIGN * _LANES) * _ROW_ALIGN
    pad = rows_p * _LANES - n

    def to_tiles(x, dtype):
        x = x.reshape(B, n).astype(dtype)
        if pad:
            x = jnp.pad(x, ((0, 0), (0, pad)))
        return x.reshape(B, rows_p, _LANES)

    pc_t = to_tiles(pc, jnp.float32)
    gt_t = to_tiles(target, jnp.int8)          # narrow stream: 1 B/voxel, cast in-kernel
    pcd_t = to_tiles(pc_dist, jnp.float32)
    gtd_t = to_tiles(gt_dist, jnp.float32)

    # ----- tiling / grid -----
    br = max(_ROW_ALIGN, (int(block_rows) // _ROW_ALIGN) * _ROW_ALIGN)
    block_rows_eff = min(br, rows_p)                                  # multiple of 32
    n_tiles = _cdiv(rows_p, block_rows_eff)
    # 2-way row split keeps both v7x TensorCores busy when B == 1 (neutral elsewhere).
    n_splits = 2 if (B == 1 and n_tiles >= 2) else 1
    tiles_per_split = _cdiv(n_tiles, n_splits)
    need_guard = n_splits * tiles_per_split != n_tiles

    def kernel(pc_ref, gt_ref, pcd_ref, gtd_ref, out_ref):
        s = pl.program_id(1)
        t = pl.program_id(2)

        @pl.when(t == 0)
        def _():
            out_ref[...] = jnp.zeros_like(out_ref)

        gtile = s * tiles_per_split + t

        def accumulate():
            pc_v = pc_ref[0]                                  # (block_rows, 128) f32
            gt_v = gt_ref[0].astype(jnp.float32)              # int8 -> f32 in-kernel
            pcd = pcd_ref[0]
            gtd = gtd_ref[0]
            dist = pcd * pcd + gtd * gtd                      # fused dist computation
            diff = gt_v - pc_v
            prod = diff * diff * dist
            # mask the ragged tail (explicit pad and/or boundary-tile garbage)
            row = jax.lax.broadcasted_iota(jnp.int32, prod.shape, 0)
            lane = jax.lax.broadcasted_iota(jnp.int32, prod.shape, 1)
            flat = (gtile * block_rows_eff + row) * _LANES + lane
            prod = jnp.where(flat < n, prod, 0.0)
            # lane/sublane-preserving partial sum: pure vreg adds, no XLU per step
            partial = prod.reshape(block_rows_eff // 8, 8, _LANES).sum(axis=0)
            out_ref[...] += partial[None, None]

        if need_guard:
            pl.when(gtile < n_tiles)(accumulate)
        else:
            accumulate()

    if need_guard:
        def row_idx(s, t):
            return jnp.minimum(s * tiles_per_split + t, n_tiles - 1)
    else:
        def row_idx(s, t):
            return s * tiles_per_split + t

    block = (1, block_rows_eff, _LANES)
    in_map = lambda b, s, t: (b, row_idx(s, t), 0)

    partial_sums = pl.pallas_call(
        kernel,
        out_shape=jax.ShapeDtypeStruct((B, n_splits, 8, _LANES), jnp.float32),
        grid=(B, n_splits, tiles_per_split),
        in_specs=[
            pl.BlockSpec(block, in_map),   # pc      f32
            pl.BlockSpec(block, in_map),   # target  int8
            pl.BlockSpec(block, in_map),   # pc_dist f32
            pl.BlockSpec(block, in_map),   # gt_dist f32
        ],
        out_specs=pl.BlockSpec((1, 1, 8, _LANES), lambda b, s, t: (b, s, 0, 0)),
        compiler_params=pltpu.CompilerParams(
            dimension_semantics=("parallel", "parallel", "arbitrary"),
            vmem_limit_bytes=48 * 1024 * 1024),   # 2x(3*f32+int8) tiles @4096 ≈ 13 MiB
    )(pc_t, gt_t, pcd_t, gtd_t)

    return jnp.sum(partial_sums) / jnp.float32(B * n)


# ---------------------------------------------------------------------------
# pure-JAX reference (mirrors the torch module line-for-line)
# ---------------------------------------------------------------------------
def _reference(output, target):
    pc = output[:, 0, ...].astype(jnp.float32)
    gt = target.astype(jnp.float32)
    pc_dist = jax.lax.stop_gradient(_compute_edts_forhdloss(pc > 0.5))
    gt_dist = jax.lax.stop_gradient(_compute_edts_forhdloss(gt > 0.5))
    pred_error = (gt - pc) ** 2
    dist = pc_dist ** 2 + gt_dist ** 2
    return jnp.mean(pred_error * dist)


if __name__ == "__main__":
    key = jax.random.PRNGKey(0)
    k1, k2, k3, k4, k5, k6 = jax.random.split(key, 6)

    # Case 1: B=2, multi-tile accumulation, no padding (n % 4096 == 0).
    B, C, X, Y, Z = 2, 4, 32, 32, 16
    output = jax.random.normal(k1, (B, C, X, Y, Z), dtype=jnp.float32)
    target = jax.random.randint(k2, (B, X, Y, Z), 0, 2, dtype=jnp.int32)
    loss = jax.block_until_ready(bhd_loss(output, target, block_rows=64))
    ref = _reference(output, target)
    assert jnp.allclose(loss, ref, rtol=1e-4, atol=1e-4), (loss, ref)

    # Case 2: B=1 -> 2-way row split (megacore path), uneven split exercises the
    # clamped/guarded duplicate tile.
    output2 = jax.random.normal(k3, (1, 2, 32, 32, 12), dtype=jnp.float32)
    target2 = jax.random.randint(k4, (1, 32, 32, 12), 0, 2, dtype=jnp.int32)
    loss2 = jax.block_until_ready(bhd_loss(output2, target2, block_rows=32))
    ref2 = _reference(output2, target2)
    assert jnp.allclose(loss2, ref2, rtol=1e-4, atol=1e-4), (loss2, ref2)

    # Case 3: ragged volume (n not a multiple of 128) exercises the pad + in-kernel
    # iota-vs-n masking path with the default block_rows.
    output3 = jax.random.normal(k5, (1, 2, 16, 16, 7), dtype=jnp.float32)
    target3 = jax.random.randint(k6, (1, 16, 16, 7), 0, 2, dtype=jnp.int32)
    loss3 = jax.block_until_ready(bhd_loss(output3, target3))
    ref3 = _reference(output3, target3)
    assert jnp.allclose(loss3, ref3, rtol=1e-4, atol=1e-4), (loss3, ref3)

    print("KERNEL_OK")
</pallas_src>

<mosaic_0001>
module attributes {stable_mosaic.version = 11 : i64} {
  func.func @kernel(%arg0: i32, %arg1: i32, %arg2: i32, %arg3: memref<1x64x128xf32, #tpu.memory_space<vmem>>, %arg4: memref<1x64x128xi8, #tpu.memory_space<vmem>>, %arg5: memref<1x64x128xf32, #tpu.memory_space<vmem>>, %arg6: memref<1x64x128xf32, #tpu.memory_space<vmem>>, %arg7: memref<1x1x8x128xf32, #tpu.memory_space<vmem>>) attributes {dimension_semantics = [#tpu.dimension_semantics<parallel>, #tpu.dimension_semantics<parallel>, #tpu.dimension_semantics<arbitrary>], iteration_bounds = array<i64: 2, 1, 2>, scalar_prefetch = 0 : i64, scratch_operands = 0 : i64, tpu.core_type = #tpu.core_type<tc>, window_params = [{transform_indices = @transform_0, window_bounds = array<i64: 1, 64, 128>}, {transform_indices = @transform_1, window_bounds = array<i64: 1, 64, 128>}, {transform_indices = @transform_2, window_bounds = array<i64: 1, 64, 128>}, {transform_indices = @transform_3, window_bounds = array<i64: 1, 64, 128>}, {transform_indices = @transform_4, window_bounds = array<i64: 1, 1, 8, 128>}]} {
    %c0_i32 = arith.constant 0 : i32
    %0 = arith.cmpi eq, %arg2, %c0_i32 : i32
    %1 = arith.extui %0 : i1 to i32
    %c0_i32_0 = arith.constant 0 : i32
    %2 = arith.cmpi ne, %1, %c0_i32_0 : i32
    scf.if %2 {
      %cst_21 = arith.constant 0.000000e+00 : f32
      %38 = vector.broadcast %cst_21 : f32 to vector<1x1x8x128xf32>
      %c0_22 = arith.constant 0 : index
      %c0_23 = arith.constant 0 : index
      %c0_24 = arith.constant 0 : index
      %c0_25 = arith.constant 0 : index
      %39 = vector.load %arg7[%c0_22, %c0_23, %c0_24, %c0_25] : memref<1x1x8x128xf32, #tpu.memory_space<vmem>>, vector<1x1x8x128xf32>
      tpu.vector_store %arg7[%c0_22, %c0_23, %c0_24, %c0_25], %38 {strides = array<i32>} : memref<1x1x8x128xf32, #tpu.memory_space<vmem>>, vector<1x1x8x128xf32>,
    } else {
    }
    %c2_i32 = arith.constant 2 : i32
    %3 = arith.muli %arg1, %c2_i32 : i32
    %4 = arith.addi %3, %arg2 : i32
    %c0 = arith.constant 0 : index
    %c0_1 = arith.constant 0 : index
    %c0_2 = arith.constant 0 : index
    %5 = vector.load %arg3[%c0, %c0_1, %c0_2] : memref<1x64x128xf32, #tpu.memory_space<vmem>>, vector<1x64x128xf32>
    %6 = vector.shape_cast %5 : vector<1x64x128xf32> to vector<64x128xf32>
    %c0_3 = arith.constant 0 : index
    %c0_4 = arith.constant 0 : index
    %c0_5 = arith.constant 0 : index
    %7 = vector.load %arg4[%c0_3, %c0_4, %c0_5] : memref<1x64x128xi8, #tpu.memory_space<vmem>>, vector<1x64x128xi8>
    %8 = vector.shape_cast %7 : vector<1x64x128xi8> to vector<64x128xi8>
    %9 = arith.sitofp %8 : vector<64x128xi8> to vector<64x128xf32>
    %c0_6 = arith.constant 0 : index
    %c0_7 = arith.constant 0 : index
    %c0_8 = arith.constant 0 : index
    %10 = vector.load %arg5[%c0_6, %c0_7, %c0_8] : memref<1x64x128xf32, #tpu.memory_space<vmem>>, vector<1x64x128xf32>
    %11 = vector.shape_cast %10 : vector<1x64x128xf32> to vector<64x128xf32>
    %c0_9 = arith.constant 0 : index
    %c0_10 = arith.constant 0 : index
    %c0_11 = arith.constant 0 : index
    %12 = vector.load %arg6[%c0_9, %c0_10, %c0_11] : memref<1x64x128xf32, #tpu.memory_space<vmem>>, vector<1x64x128xf32>
    %13 = vector.shape_cast %12 : vector<1x64x128xf32> to vector<64x128xf32>
    %14 = arith.mulf %11, %11 : vector<64x128xf32>
    %15 = arith.mulf %13, %13 : vector<64x128xf32>
    %16 = arith.addf %14, %15 : vector<64x128xf32>
    %17 = arith.subf %9, %6 : vector<64x128xf32>
    %18 = arith.mulf %17, %17 : vector<64x128xf32>
    %19 = arith.mulf %18, %16 : vector<64x128xf32>
    %20 = tpu.iota {dimensions = array<i32: 0>} : vector<64x128xi32>
    %21 = tpu.iota {dimensions = array<i32: 1>} : vector<64x128xi32>
    %c64_i32 = arith.constant 64 : i32
    %22 = arith.muli %4, %c64_i32 : i32
    %23 = vector.broadcast %22 : i32 to vector<64x128xi32>
    %24 = arith.addi %23, %20 : vector<64x128xi32>
    %c128_i32 = arith.constant 128 : i32
    %25 = vector.broadcast %c128_i32 : i32 to vector<64x128xi32>
    %26 = arith.muli %24, %25 : vector<64x128xi32>
    %27 = arith.addi %26, %21 : vector<64x128xi32>
    %c16384_i32 = arith.constant 16384 : i32
    %28 = vector.broadcast %c16384_i32 : i32 to vector<64x128xi32>
    %29 = arith.cmpi slt, %27, %28 : vector<64x128xi32>
    %cst = arith.constant 0.000000e+00 : f32
    %30 = vector.broadcast %cst : f32 to vector<64x128xf32>
    %31 = arith.select %29, %19, %30 : vector<64x128xi1>, vector<64x128xf32>
    %32 = vector.shape_cast %31 : vector<64x128xf32> to vector<8x8x128xf32>
    %cst_12 = arith.constant dense<0.000000e+00> : vector<8x128xf32>
    %33 = vector.multi_reduction <add>, %32, %cst_12 [0] : vector<8x8x128xf32> to vector<8x128xf32>
    %c0_13 = arith.constant 0 : index
    %c0_14 = arith.constant 0 : index
    %c0_15 = arith.constant 0 : index
    %c0_16 = arith.constant 0 : index
    %34 = vector.load %arg7[%c0_13, %c0_14, %c0_15, %c0_16] : memref<1x1x8x128xf32, #tpu.memory_space<vmem>>, vector<1x1x8x128xf32>
    %35 = vector.shape_cast %33 : vector<8x128xf32> to vector<1x1x8x128xf32>
    %36 = arith.addf %34, %35 : vector<1x1x8x128xf32>
    %c0_17 = arith.constant 0 : index
    %c0_18 = arith.constant 0 : index
    %c0_19 = arith.constant 0 : index
    %c0_20 = arith.constant 0 : index
    %37 = vector.load %arg7[%c0_17, %c0_18, %c0_19, %c0_20] : memref<1x1x8x128xf32, #tpu.memory_space<vmem>>, vector<1x1x8x128xf32>
    tpu.vector_store %arg7[%c0_17, %c0_18, %c0_19, %c0_20], %36 {strides = array<i32>} : memref<1x1x8x128xf32, #tpu.memory_space<vmem>>, vector<1x1x8x128xf32>,
    return
  }
  func.func @transform_0(%arg0: i32, %arg1: i32, %arg2: i32) -> (i32, i32, i32) {
    %c2_i32 = arith.constant 2 : i32
    %0 = arith.muli %arg1, %c2_i32 : i32
    %1 = arith.addi %0, %arg2 : i32
    %c0_i32 = arith.constant 0 : i32
    %c0_i32_0 = arith.constant 0 : i32
    return %arg0, %1, %c0_i32 : i32, i32, i32
  }
  func.func @transform_1(%arg0: i32, %arg1: i32, %arg2: i32) -> (i32, i32, i32) {
    %c2_i32 = arith.constant 2 : i32
    %0 = arith.muli %arg1, %c2_i32 : i32
    %1 = arith.addi %0, %arg2 : i32
    %c0_i32 = arith.constant 0 : i32
    %c0_i32_0 = arith.constant 0 : i32
    return %arg0, %1, %c0_i32 : i32, i32, i32
  }
  func.func @transform_2(%arg0: i32, %arg1: i32, %arg2: i32) -> (i32, i32, i32) {
    %c2_i32 = arith.constant 2 : i32
    %0 = arith.muli %arg1, %c2_i32 : i32
    %1 = arith.addi %0, %arg2 : i32
    %c0_i32 = arith.constant 0 : i32
    %c0_i32_0 = arith.constant 0 : i32
    return %arg0, %1, %c0_i32 : i32, i32, i32
  }
  func.func @transform_3(%arg0: i32, %arg1: i32, %arg2: i32) -> (i32, i32, i32) {
    %c2_i32 = arith.constant 2 : i32
    %0 = arith.muli %arg1, %c2_i32 : i32
    %1 = arith.addi %0, %arg2 : i32
    %c0_i32 = arith.constant 0 : i32
    %c0_i32_0 = arith.constant 0 : i32
    return %arg0, %1, %c0_i32 : i32, i32, i32
  }
  func.func @transform_4(%arg0: i32, %arg1: i32, %arg2: i32) -> (i32, i32, i32, i32) {
    %c0_i32 = arith.constant 0 : i32
    %c0_i32_0 = arith.constant 0 : i32
    %c0_i32_1 = arith.constant 0 : i32
    return %arg0, %arg1, %c0_i32, %c0_i32_0 : i32, i32, i32, i32
  }
}

</mosaic_0001>

<llo_original>
// kernel: tpu_custom_call.1
$region0: #{tpu_custom_call.1}
  #allocation0 [shape = 'u32[]', space=smem, size = 0x4, offset = 0x4, fixed_abs, tag = 'smem constant byte address 0x4 - core index']
  #allocation1 [shape = 'u32[144,128]{1,0:T(1,128)}', space=vmem, size = 0x12000, scoped, tag = 'internal scratch']
  %s0 = inlined_call_operand.hbm [shape: f32[2,128,128], index: 0, kind: input, shape index: {}]
  %s1 = inlined_call_operand.hbm [shape: s8[2,128,128], index: 1, kind: input, shape index: {}]
  %s2 = inlined_call_operand.hbm [shape: f32[2,128,128], index: 2, kind: input, shape index: {}]
  %s3 = inlined_call_operand.hbm [shape: f32[2,128,128], index: 3, kind: input, shape index: {}]
  %s4 = inlined_call_operand.hbm [shape: f32[2,1,8,128], index: 4, kind: output, shape index: {}]
  %s5 = sld [smem:[#allocation0]]
  $region69: #{tpu_custom_call.1} parent=0
    _
  %s7 = ssub.s32 1, %s5
  %s8 = scalar_select 0, %s7, %s5
  $region1: #{tpu_custom_call.1} parent=0
    #allocation2 [shape = 'u8[65536]{0}', space=vmem, size = 0x10000, scoped, tag = 'input window, operand 0']
    #allocation3 [shape = 's32[2]{0}', space=sflag, size = 0x8, scoped, tag = 'scoped memory for tpu_custom_call.1']
    #allocation4 [shape = 's32[2]{0}', space=sflag, size = 0x8, scoped, tag = 'scoped memory for tpu_custom_call.1']
    #allocation5 [shape = 'u8[16384]{0}', space=vmem, size = 0x4000, scoped, tag = 'input window, operand 1']
    #allocation6 [shape = 's32[2]{0}', space=sflag, size = 0x8, scoped, tag = 'scoped memory for tpu_custom_call.1']
    #allocation7 [shape = 'u8[65536]{0}', space=vmem, size = 0x10000, scoped, tag = 'input window, operand 2']
    #allocation8 [shape = 'u8[65536]{0}', space=vmem, size = 0x10000, scoped, tag = 'input window, operand 3']
    #allocation9 [shape = 's32[2]{0}', space=sflag, size = 0x8, scoped, tag = 'scoped memory for tpu_custom_call.1']
    #allocation10 [shape = 'u8[8192]{0}', space=vmem, size = 0x2000, scoped, tag = 'output window, operand 0']
    %9 = vsyncpa [#allocation3], 0
    %s10 = scalar_lea.sflag [#allocation3], 1
    %11 = vsyncpa %s10, 0
    %12 = vsyncpa [#allocation6], 0
    %s13 = scalar_lea.sflag [#allocation6], 1
    %14 = vsyncpa %s13, 0
    %15 = vsyncpa [#allocation9], 0
    %s16 = scalar_lea.sflag [#allocation9], 1
    %17 = vsyncpa %s16, 0
    %18 = vsyncpa [#allocation4], 0
    %s19 = scalar_lea.sflag [#allocation4], 1
    %20 = vsyncpa %s19, 0
    loop: start=0, step=1, limit=6
    $region2: #{tpu_custom_call.1} parent=1 // loop_pre_header
      _
    $region3: #{tpu_custom_call.1} parent=1 // loop_header
      %s22 = sphi 0, %s26
      %p23 = scmp.ge.s32.totalorder %s22, 6
      %s29 = sphi 0, %s48
      %s30 = sphi 0, %s44
      %s31 = sphi 0, %s40
      %s32 = sphi 0, %s29
      %s33 = sphi 0, %s30
      %s34 = sphi 0, %s31
      %s35 = sphi 0, %s32
      %s36 = sphi 0, %s33
      %s37 = sphi 0, %s34
      %s57 = sphi 0, %s59
      %s60 = sphi 0, %s57
      %s61 = sphi 0, %s60
      %s77 = sphi 0, %s61
      %s89 = sphi 0, %s91
      %s92 = sphi 0, %s89
      %s93 = sphi 0, %s92
      %s109 = sphi 0, %s93
      %s121 = sphi 0, %s123
      %s124 = sphi 0, %s121
      %s125 = sphi 0, %s124
      %s141 = sphi 0, %s125
      %s153 = sphi 0, %s155
      %s156 = sphi 0, %s153
      %s157 = sphi 0, %s156
      %s173 = sphi 0, %s157
      %s181 = sphi 0, %s183
      %s184 = sphi 0, %s181
      %s185 = sphi 0, %s184
      %s201 = sphi 0, %s185
    $region4: #{tpu_custom_call.1} parent=1 // loop_header_branch
      %25 = sbr.rel (%p23) target = $region8
    $region5: #{tpu_custom_call.1} parent=1 // loop_body
      %s27 = ssub.s32 %s22, 1
      %s28 = ssub.s32 %s22, 2
      %s38 = sadd.s32 1, %s31
      %p39 = scmp.ge.s32.totalorder %s38, 2
      %s40 = scalar_select %p39, 0, %s38
      %s41 = sadd.s32 1, %s30
      %s42 = scalar_select %p39, %s41, %s30
      %p43 = scmp.ge.s32.totalorder %s42, 1
      %s44 = scalar_select %p43, 0, %s42
      %s45 = sadd.s32 1, %s29
      %s46 = scalar_select %p43, %s45, %s29
      %p47 = scmp.ge.s32.totalorder %s46, 2
      %s48 = scalar_select %p47, 0, %s46
      %s49 = smul.u32 %s30, 2
      %s50 = sadd.s32 %s49, %s31
      %s51 = smul.u32 %s44, 2
      %s52 = sadd.s32 %s51, %s40
      %s53 = ssub.s32 %s29, %s48
      %s54 = ssub.s32 %s50, %s52
      %s55 = sor.u32 %s53, %s54
      %p56 = scmp.eq.s32.totalorder %s55, 0
      %s58 = sadd.s32 %s57, 1
      %s59 = scalar_select %p56, %s57, %s58
      %p62 = pneg %p56
      %p63 = scmp.eq.s32.totalorder %s22, 3
      %p64 = por %p62, %p63
      %p65 = scmp.ne.s32.totalorder %s57, %s60
      %p66 = scmp.eq.s32.totalorder %s22, 0
      %p67 = por %p65, %p66
      %p68 = scmp.ne.s32.totalorder %s57, %s60
      %p69 = scmp.eq.s32.totalorder %s27, 3
      %p70 = por %p68, %p69
      %p71 = scmp.ne.s32.totalorder %s60, %s61
      %p72 = scmp.eq.s32.totalorder %s27, 0
      %p73 = por %p71, %p72
      %p74 = scmp.ne.s32.totalorder %s60, %s61
      %p75 = scmp.eq.s32.totalorder %s28, 3
      %p76 = por %p74, %p75
      %p78 = scmp.ne.s32.totalorder %s61, %s77
      %p79 = scmp.eq.s32.totalorder %s28, 0
      %p80 = por %p78, %p79
      %s81 = smul.u32 %s30, 2
      %s82 = sadd.s32 %s81, %s31
      %s83 = smul.u32 %s44, 2
      %s84 = sadd.s32 %s83, %s40
      %s85 = ssub.s32 %s29, %s48
      %s86 = ssub.s32 %s82, %s84
      %s87 = sor.u32 %s85, %s86
      %p88 = scmp.eq.s32.totalorder %s87, 0
      %s90 = sadd.s32 %s89, 1
      %s91 = scalar_select %p88, %s89, %s90
      %p94 = pneg %p88
      %p95 = scmp.eq.s32.totalorder %s22, 3
      %p96 = por %p94, %p95
      %p97 = scmp.ne.s32.totalorder %s89, %s92
      %p98 = scmp.eq.s32.totalorder %s22, 0
      %p99 = por %p97, %p98
      %p100 = scmp.ne.s32.totalorder %s89, %s92
      %p101 = scmp.eq.s32.totalorder %s27, 3
      %p102 = por %p100, %p101
      %p103 = scmp.ne.s32.totalorder %s92, %s93
      %p104 = scmp.eq.s32.totalorder %s27, 0
      %p105 = por %p103, %p104
      %p106 = scmp.ne.s32.totalorder %s92, %s93
      %p107 = scmp.eq.s32.totalorder %s28, 3
      %p108 = por %p106, %p107
      %p110 = scmp.ne.s32.totalorder %s93, %s109
      %p111 = scmp.eq.s32.totalorder %s28, 0
      %p112 = por %p110, %p111
      %s113 = smul.u32 %s30, 2
      %s114 = sadd.s32 %s113, %s31
      %s115 = smul.u32 %s44, 2
      %s116 = sadd.s32 %s115, %s40
      %s117 = ssub.s32 %s29, %s48
      %s118 = ssub.s32 %s114, %s116
      %s119 = sor.u32 %s117, %s118
      %p120 = scmp.eq.s32.totalorder %s119, 0
      %s122 = sadd.s32 %s121, 1
      %s123 = scalar_select %p120, %s121, %s122
      %p126 = pneg %p120
      %p127 = scmp.eq.s32.totalorder %s22, 3
      %p128 = por %p126, %p127
      %p129 = scmp.ne.s32.totalorder %s121, %s124
      %p130 = scmp.eq.s32.totalorder %s22, 0
      %p131 = por %p129, %p130
      %p132 = scmp.ne.s32.totalorder %s121, %s124
      %p133 = scmp.eq.s32.totalorder %s27, 3
      %p134 = por %p132, %p133
      %p135 = scmp.ne.s32.totalorder %s124, %s125
      %p136 = scmp.eq.s32.totalorder %s27, 0
      %p137 = por %p135, %p136
      %p138 = scmp.ne.s32.totalorder %s124, %s125
      %p139 = scmp.eq.s32.totalorder %s28, 3
      %p140 = por %p138, %p139
      %p142 = scmp.ne.s32.totalorder %s125, %s141
      %p143 = scmp.eq.s32.totalorder %s28, 0
      %p144 = por %p142, %p143
      %s145 = smul.u32 %s30, 2
      %s146 = sadd.s32 %s145, %s31
      %s147 = smul.u32 %s44, 2
      %s148 = sadd.s32 %s147, %s40
      %s149 = ssub.s32 %s29, %s48
      %s150 = ssub.s32 %s146, %s148
      %s151 = sor.u32 %s149, %s150
      %p152 = scmp.eq.s32.totalorder %s151, 0
      %s154 = sadd.s32 %s153, 1
      %s155 = scalar_select %p152, %s153, %s154
      %p158 = pneg %p152
      %p159 = scmp.eq.s32.totalorder %s22, 3
      %p160 = por %p158, %p159
      %p161 = scmp.ne.s32.totalorder %s153, %s156
      %p162 = scmp.eq.s32.totalorder %s22, 0
      %p163 = por %p161, %p162
      %p164 = scmp.ne.s32.totalorder %s153, %s156
      %p165 = scmp.eq.s32.totalorder %s27, 3
      %p166 = por %p164, %p165
      %p167 = scmp.ne.s32.totalorder %s156, %s157
      %p168 = scmp.eq.s32.totalorder %s27, 0
      %p169 = por %p167, %p168
      %p170 = scmp.ne.s32.totalorder %s156, %s157
      %p171 = scmp.eq.s32.totalorder %s28, 3
      %p172 = por %p170, %p171
      %p174 = scmp.ne.s32.totalorder %s157, %s173
      %p175 = scmp.eq.s32.totalorder %s28, 0
      %p176 = por %p174, %p175
      %s177 = ssub.s32 %s29, %s48
      %s178 = ssub.s32 %s30, %s44
      %s179 = sor.u32 %s177, %s178
      %p180 = scmp.eq.s32.totalorder %s179, 0
      %s182 = sadd.s32 %s181, 1
      %s183 = scalar_select %p180, %s181, %s182
      %p186 = pneg %p180
      %p187 = scmp.eq.s32.totalorder %s22, 3
      %p188 = por %p186, %p187
      %p189 = scmp.ne.s32.totalorder %s181, %s184
      %p190 = scmp.eq.s32.totalorder %s22, 0
      %p191 = por %p189, %p190
      %p192 = scmp.ne.s32.totalorder %s181, %s184
      %p193 = scmp.eq.s32.totalorder %s27, 3
      %p194 = por %p192, %p193
      %p195 = scmp.ne.s32.totalorder %s184, %s185
      %p196 = scmp.eq.s32.totalorder %s27, 0
      %p197 = por %p195, %p196
      %p198 = scmp.ne.s32.totalorder %s184, %s185
      %p199 = scmp.eq.s32.totalorder %s28, 3
      %p200 = por %p198, %p199
      %p202 = scmp.ne.s32.totalorder %s185, %s201
      %p203 = scmp.eq.s32.totalorder %s28, 0
      %p204 = por %p202, %p203
      %p205 = scmp.le.s32.totalorder 1, %s22
      %p206 = scmp.lt.s32.totalorder %s22, 5
      %p207 = pnand %p205, %p206
      %p208 = pneg %p207
      // Predicated region
      $region9: #{tpu_custom_call.1} parent=5 // pred_check
        _
      $region10: #{tpu_custom_call.1} parent=5 // pred_check_branch
        %210 = sbr.rel (%p207) target = $region12
      $region11: #{tpu_custom_call.1} parent=5 // pred_region
        %s211 = ssub.s32 %s22, 1
      $region12: #{tpu_custom_call.1} parent=5 // pred_fallthru
        _
      %p212 = scmp.lt.s32.totalorder %s22, 4
      // Predicated region
      $region13: #{tpu_custom_call.1} parent=5 // pred_check
        %p213 = pneg %p212
      $region14: #{tpu_custom_call.1} parent=5 // pred_check_branch
        %215 = sbr.rel (%p213) target = $region16
      $region15: #{tpu_custom_call.1} parent=5 // pred_region
        // Predicated region
        $region17: #{tpu_custom_call.1} parent=15 // pred_check
          %p216 = pneg %p67
        $region18: #{tpu_custom_call.1} parent=15 // pred_check_branch
          %218 = sbr.rel (%p216) target = $region20
        $region19: #{tpu_custom_call.1} parent=15 // pred_region
          %s219 = sand.u32 %s57, 1
          %s220 = scalar_lea.sflag [#allocation3], %s219
          %s221 = sand.u32 %s57, 1
          %s222 = smul.addr %s221, 64
          %s223 = scalar_lea.vmem [#allocation2], %s222
          %s224 = smul.u32 %s30, 2
          %s225 = sadd.s32 %s224, %s31
          %s226 = smul.u32 8, %s225
          %s228 = ssub.s32 1024, 1024
          %229 = vsyncadd %s220, %s228
          %s230 = smul.addr %s29, 16
          %s231 = sadd.s32 %s226, %s230
          %s232 = smul.addr %s231, 128
          %s233 = scalar_lea.hbm %s0, %s232
          %s234 = sshll.u32 %s223, 4
          %s235 = int_to_ptr.vmem [resolvable:$true] %s234
          %240 = dma.hbm_to_vmem [thread:$0]  %s233, 1024, %s235, %s220, 128, 128, 8
        $region20: #{tpu_custom_call.1} parent=15 // pred_fallthru
          _
        // Predicated region
        $region21: #{tpu_custom_call.1} parent=15 // pred_check
          %p241 = pneg %p99
        $region22: #{tpu_custom_call.1} parent=15 // pred_check_branch
          %243 = sbr.rel (%p241) target = $region24
        $region23: #{tpu_custom_call.1} parent=15 // pred_region
          %s244 = sand.u32 %s22, 1
          %s245 = scalar_lea.sflag [#allocation6], %s244
          %s246 = sand.u32 %s89, 1
          %s247 = smul.addr %s246, 16
          %s248 = scalar_lea.vmem [#allocation5], %s247
          %s249 = smul.u32 %s30, 2
          %s250 = sadd.s32 %s249, %s31
          %s251 = smul.u32 2, %s250
          %s253 = ssub.s32 256, 256
          %254 = vsyncadd %s245, %s253
          %s255 = smul.addr %s29, 4
          %s256 = sadd.s32 %s251, %s255
          %s257 = smul.addr %s256, 128
          %s258 = scalar_lea.hbm %s1, %s257
          %s259 = sshll.u32 %s248, 4
          %s260 = int_to_ptr.vmem [resolvable:$true] %s259
          %265 = dma.hbm_to_vmem [thread:$0]  %s258, 256, %s260, %s245, 128, 128, 8
        $region24: #{tpu_custom_call.1} parent=15 // pred_fallthru
          _
        // Predicated region
        $region25: #{tpu_custom_call.1} parent=15 // pred_check
          %p266 = pneg %p131
        $region26: #{tpu_custom_call.1} parent=15 // pred_check_branch
          %268 = sbr.rel (%p266) target = $region28
        $region27: #{tpu_custom_call.1} parent=15 // pred_region
          %s269 = sand.u32 %s22, 1
          %s270 = scalar_lea.sflag [#allocation6], %s269
          %s271 = sand.u32 %s121, 1
          %s272 = smul.addr %s271, 64
          %s273 = scalar_lea.vmem [#allocation7], %s272
          %s274 = smul.u32 %s30, 2
          %s275 = sadd.s32 %s274, %s31
          %s276 = smul.u32 8, %s275
          %s278 = ssub.s32 1024, 1024
          %279 = vsyncadd %s270, %s278
          %s280 = smul.addr %s29, 16
          %s281 = sadd.s32 %s276, %s280
          %s282 = smul.addr %s281, 128
          %s283 = scalar_lea.hbm %s2, %s282
          %s284 = sshll.u32 %s273, 4
          %s285 = int_to_ptr.vmem [resolvable:$true] %s284
          %290 = dma.hbm_to_vmem [thread:$0]  %s283, 1024, %s285, %s270, 128, 128, 8
        $region28: #{tpu_custom_call.1} parent=15 // pred_fallthru
          _
        // Predicated region
        $region29: #{tpu_custom_call.1} parent=15 // pred_check
          %p291 = pneg %p163
        $region30: #{tpu_custom_call.1} parent=15 // pred_check_branch
          %293 = sbr.rel (%p291) target = $region32
        $region31: #{tpu_custom_call.1} parent=15 // pred_region
          %s294 = sand.u32 %s153, 1
          %s295 = scalar_lea.sflag [#allocation9], %s294
          %s296 = sand.u32 %s153, 1
          %s297 = smul.addr %s296, 64
          %s298 = scalar_lea.vmem [#allocation8], %s297
          %s299 = smul.u32 %s30, 2
          %s300 = sadd.s32 %s299, %s31
          %s301 = smul.u32 8, %s300
          %s303 = ssub.s32 1024, 1024
          %304 = vsyncadd %s295, %s303
          %s305 = smul.addr %s29, 16
          %s306 = sadd.s32 %s301, %s305
          %s307 = smul.addr %s306, 128
          %s308 = scalar_lea.hbm %s3, %s307
          %s309 = sshll.u32 %s298, 4
          %s310 = int_to_ptr.vmem [resolvable:$true] %s309
          %315 = dma.hbm_to_vmem [thread:$0]  %s308, 1024, %s310, %s295, 128, 128, 8
        $region32: #{tpu_custom_call.1} parent=15 // pred_fallthru
          _
      $region16: #{tpu_custom_call.1} parent=5 // pred_fallthru
        _
      %p316 = scmp.le.s32.totalorder 1, %s22
      %p317 = scmp.lt.s32.totalorder %s22, 5
      %p318 = pnand %p316, %p317
      %p319 = pneg %p318
      // Predicated region
      $region33: #{tpu_custom_call.1} parent=5 // pred_check
        _
      $region34: #{tpu_custom_call.1} parent=5 // pred_check_branch
        %321 = sbr.rel (%p318) target = $region36
      $region35: #{tpu_custom_call.1} parent=5 // pred_region
        %s322 = ssub.s32 %s22, 1
        %s323 = sand.u32 %s60, 1
        %s324 = scalar_lea.sflag [#allocation3], %s323
        %s325 = sand.u32 %s60, 1
        %s326 = smul.addr %s325, 64
        %s327 = scalar_lea.vmem [#allocation2], %s326
        // Predicated region
        $region37: #{tpu_custom_call.1} parent=35 // pred_check
          %p328 = pneg %p73
        $region38: #{tpu_custom_call.1} parent=35 // pred_check_branch
          %330 = sbr.rel (%p328) target = $region40
        $region39: #{tpu_custom_call.1} parent=35 // pred_region
          %331 = dma.done %s324, 1024
        $region40: #{tpu_custom_call.1} parent=35 // pred_fallthru
          _
        %s332 = sand.u32 %s27, 1
        %s333 = scalar_lea.sflag [#allocation6], %s332
        %s334 = sand.u32 %s92, 1
        %s335 = smul.addr %s334, 16
        %s336 = scalar_lea.vmem [#allocation5], %s335
        // Predicated region
        $region41: #{tpu_custom_call.1} parent=35 // pred_check
          %p337 = pneg %p105
        $region42: #{tpu_custom_call.1} parent=35 // pred_check_branch
          %339 = sbr.rel (%p337) target = $region44
        $region43: #{tpu_custom_call.1} parent=35 // pred_region
          %340 = dma.done %s333, 256
        $region44: #{tpu_custom_call.1} parent=35 // pred_fallthru
          _
        %s341 = sand.u32 %s27, 1
        %s342 = scalar_lea.sflag [#allocation6], %s341
        %s343 = sand.u32 %s124, 1
        %s344 = smul.addr %s343, 64
        %s345 = scalar_lea.vmem [#allocation7], %s344
        // Predicated region
        $region45: #{tpu_custom_call.1} parent=35 // pred_check
          %p346 = pneg %p137
        $region46: #{tpu_custom_call.1} parent=35 // pred_check_branch
          %348 = sbr.rel (%p346) target = $region48
        $region47: #{tpu_custom_call.1} parent=35 // pred_region
          %349 = dma.done %s342, 1024
        $region48: #{tpu_custom_call.1} parent=35 // pred_fallthru
          _
        %s350 = sand.u32 %s156, 1
        %s351 = scalar_lea.sflag [#allocation9], %s350
        %s352 = sand.u32 %s156, 1
        %s353 = smul.addr %s352, 64
        %s354 = scalar_lea.vmem [#allocation8], %s353
        // Predicated region
        $region49: #{tpu_custom_call.1} parent=35 // pred_check
          %p355 = pneg %p169
        $region50: #{tpu_custom_call.1} parent=35 // pred_check_branch
          %357 = sbr.rel (%p355) target = $region52
        $region51: #{tpu_custom_call.1} parent=35 // pred_region
          %358 = dma.done %s351, 1024
        $region52: #{tpu_custom_call.1} parent=35 // pred_fallthru
          _
        %s359 = sand.u32 %s60, 1
        %s360 = scalar_lea.sflag [#allocation3], %s359
        %s361 = sand.u32 %s60, 1
        %s362 = smul.addr %s361, 64
        %s363 = scalar_lea.vmem [#allocation2], %s362
        %p364 = pneg %p73
        %p365 = pneg %p70
        %s366 = sand.u32 %s27, 1
        %s367 = scalar_lea.sflag [#allocation6], %s366
        %s368 = sand.u32 %s92, 1
        %s369 = smul.addr %s368, 16
        %s370 = scalar_lea.vmem [#allocation5], %s369
        %p371 = pneg %p105
        %p372 = pneg %p102
        %s373 = sand.u32 %s27, 1
        %s374 = scalar_lea.sflag [#allocation6], %s373
        %s375 = sand.u32 %s124, 1
        %s376 = smul.addr %s375, 64
        %s377 = scalar_lea.vmem [#allocation7], %s376
        %p378 = pneg %p137
        %p379 = pneg %p134
        %s380 = sand.u32 %s156, 1
        %s381 = scalar_lea.sflag [#allocation9], %s380
        %s382 = sand.u32 %s156, 1
        %s383 = smul.addr %s382, 64
        %s384 = scalar_lea.vmem [#allocation8], %s383
        %p385 = pneg %p169
        %p386 = pneg %p166
        %p387 = pneg %p197
        %p388 = pneg %p194
        %s389 = sand.u32 %s184, 1
        %s390 = scalar_lea.sflag [#allocation4], %s389
        %s391 = sand.u32 %s184, 1
        %s392 = smul.addr %s391, 8
        %s393 = scalar_lea.vmem [#allocation10], %s392
        %s394 = smul.u32 %s33, 2
        %s395 = sadd.s32 %s394, %s34
        %s396 = smul.u32 8, %s395
        %s397 = smul.u32 %s33, 2
        %s398 = sadd.s32 %s397, %s34
        %s399 = smul.u32 2, %s398
        %s400 = smul.u32 %s33, 2
        %s401 = sadd.s32 %s400, %s34
        %s402 = smul.u32 8, %s401
        %s403 = smul.u32 %s33, 2
        %s404 = sadd.s32 %s403, %s34
        %s405 = smul.u32 8, %s404
        %p406 = scmp.eq.s32.totalorder %s34, 0
        // Predicated region
        $region53: #{tpu_custom_call.1} parent=35 // pred_check
          %p407 = pneg %p406
        $region54: #{tpu_custom_call.1} parent=35 // pred_check_branch
          %409 = sbr.rel (%p407) target = $region56
        $region55: #{tpu_custom_call.1} parent=35 // pred_region
          %410 = vst [vmem:[%s393] sm:$0xff] 0.0
        $region56: #{tpu_custom_call.1} parent=35 // pred_fallthru
          _
        %s411 = smul.u32 %s33, 2
        %s412 = sadd.s32 %s411, %s34
        %v413 = vld [vmem:[%s327] sm:$0xff]
        %v414 = vld [vmem:[%s327 + $0x8] sm:$0xff]
        %v415 = vld [vmem:[%s327 + $0x10] sm:$0xff]
        %v416 = vld [vmem:[%s327 + $0x18] sm:$0xff]
        %v417 = vld [vmem:[%s327 + $0x20] sm:$0xff]
        %v418 = vld [vmem:[%s327 + $0x28] sm:$0xff]
        %v419 = vld [vmem:[%s327 + $0x30] sm:$0xff]
        %v420 = vld [vmem:[%s327 + $0x38] sm:$0xff]
        %v421 = vld [vmem:[%s336] sm:$0xff]
        %v422 = vld [vmem:[%s336 + $0x8] sm:$0xff]
        %v423 = vunpack.c.0.s8 %v421
        %v424 = vunpack.c.1.s8 %v421
        %v425 = vunpack.c.2.s8 %v421
        %v426 = vunpack.c.3.s8 %v421
        %v427 = vunpack.c.0.s8 %v422
        %v428 = vunpack.c.1.s8 %v422
        %v429 = vunpack.c.2.s8 %v422
        %v430 = vunpack.c.3.s8 %v422
        %v431 = vcvt.s32.f32 %v423
        %v432 = vcvt.s32.f32 %v424
        %v433 = vcvt.s32.f32 %v425
        %v434 = vcvt.s32.f32 %v426
        %v435 = vcvt.s32.f32 %v427
        %v436 = vcvt.s32.f32 %v428
        %v437 = vcvt.s32.f32 %v429
        %v438 = vcvt.s32.f32 %v430
        %v439 = vld [vmem:[%s345] sm:$0xff]
        %v440 = vld [vmem:[%s345 + $0x8] sm:$0xff]
        %v441 = vld [vmem:[%s345 + $0x10] sm:$0xff]
        %v442 = vld [vmem:[%s345 + $0x18] sm:$0xff]
        %v443 = vld [vmem:[%s345 + $0x20] sm:$0xff]
        %v444 = vld [vmem:[%s345 + $0x28] sm:$0xff]
        %v445 = vld [vmem:[%s345 + $0x30] sm:$0xff]
        %v446 = vld [vmem:[%s345 + $0x38] sm:$0xff]
        %v447 = vld [vmem:[%s354] sm:$0xff]
        %v448 = vld [vmem:[%s354 + $0x8] sm:$0xff]
        %v449 = vld [vmem:[%s354 + $0x10] sm:$0xff]
        %v450 = vld [vmem:[%s354 + $0x18] sm:$0xff]
        %v451 = vld [vmem:[%s354 + $0x20] sm:$0xff]
        %v452 = vld [vmem:[%s354 + $0x28] sm:$0xff]
        %v453 = vld [vmem:[%s354 + $0x30] sm:$0xff]
        %v454 = vld [vmem:[%s354 + $0x38] sm:$0xff]
        %v455 = vmul.f32 %v439, %v439
        %v456 = vmul.f32 %v440, %v440
        %v457 = vmul.f32 %v441, %v441
        %v458 = vmul.f32 %v442, %v442
        %v459 = vmul.f32 %v443, %v443
        %v460 = vmul.f32 %v444, %v444
        %v461 = vmul.f32 %v445, %v445
        %v462 = vmul.f32 %v446, %v446
        %v463 = vmul.f32 %v447, %v447
        %v464 = vmul.f32 %v448, %v448
        %v465 = vmul.f32 %v449, %v449
        %v466 = vmul.f32 %v450, %v450
        %v467 = vmul.f32 %v451, %v451
        %v468 = vmul.f32 %v452, %v452
        %v469 = vmul.f32 %v453, %v453
        %v470 = vmul.f32 %v454, %v454
        %v471 = vadd.f32 %v455, %v463
        %v472 = vadd.f32 %v456, %v464
        %v473 = vadd.f32 %v457, %v465
        %v474 = vadd.f32 %v458, %v466
        %v475 = vadd.f32 %v459, %v467
        %v476 = vadd.f32 %v460, %v468
        %v477 = vadd.f32 %v461, %v469
        %v478 = vadd.f32 %v462, %v470
        %v479 = vsub.f32 %v431, %v413
        %v480 = vsub.f32 %v432, %v414
        %v481 = vsub.f32 %v433, %v415
        %v482 = vsub.f32 %v434, %v416
        %v483 = vsub.f32 %v435, %v417
        %v484 = vsub.f32 %v436, %v418
        %v485 = vsub.f32 %v437, %v419
        %v486 = vsub.f32 %v438, %v420
        %v487 = vmul.f32 %v479, %v479
        %v488 = vmul.f32 %v480, %v480
        %v489 = vmul.f32 %v481, %v481
        %v490 = vmul.f32 %v482, %v482
        %v491 = vmul.f32 %v483, %v483
        %v492 = vmul.f32 %v484, %v484
        %v493 = vmul.f32 %v485, %v485
        %v494 = vmul.f32 %v486, %v486
        %v495 = vmul.f32 %v487, %v471
        %v496 = vmul.f32 %v488, %v472
        %v497 = vmul.f32 %v489, %v473
        %v498 = vmul.f32 %v490, %v474
        %v499 = vmul.f32 %v491, %v475
        %v500 = vmul.f32 %v492, %v476
        %v501 = vmul.f32 %v493, %v477
        %v502 = vmul.f32 %v494, %v478
        %v503 = vlaneseq
        %v504 = vshrl.u32 %v503, 7
        %v505 = vadd.s32 %v504, 8
        %v506 = vadd.s32 %v504, 16
        %v507 = vadd.s32 %v504, 24
        %v508 = vadd.s32 %v504, 32
        %v509 = vadd.s32 %v504, 40
        %v510 = vadd.s32 %v504, 48
        %v511 = vadd.s32 %v504, 56
        %v512 = vlaneseq
        %v513 = vand.u32 %v512, 127
        %s514 = smul.u32 %s412, 64
        %v515 = vstv %s514
        %v516 = vadd.s32 %v515, %v504
        %v517 = vadd.s32 %v515, %v505
        %v518 = vadd.s32 %v515, %v506
        %v519 = vadd.s32 %v515, %v507
        %v520 = vadd.s32 %v515, %v508
        %v521 = vadd.s32 %v515, %v509
        %v522 = vadd.s32 %v515, %v510
        %v523 = vadd.s32 %v515, %v511
        %v524 = vmul.u32 %v516, 128
        %v525 = vmul.u32 %v517, 128
        %v526 = vmul.u32 %v518, 128
        %v527 = vmul.u32 %v519, 128
        %v528 = vmul.u32 %v520, 128
        %v529 = vmul.u32 %v521, 128
        %v530 = vmul.u32 %v522, 128
        %v531 = vmul.u32 %v523, 128
        %v532 = vadd.s32 %v524, %v513
        %v533 = vadd.s32 %v525, %v513
        %v534 = vadd.s32 %v526, %v513
        %v535 = vadd.s32 %v527, %v513
        %v536 = vadd.s32 %v528, %v513
        %v537 = vadd.s32 %v529, %v513
        %v538 = vadd.s32 %v530, %v513
        %v539 = vadd.s32 %v531, %v513
        %vm540 = vcmp.lt.s32.totalorder %v532, 16384
        %vm541 = vcmp.lt.s32.totalorder %v533, 16384
        %vm542 = vcmp.lt.s32.totalorder %v534, 16384
        %vm543 = vcmp.lt.s32.totalorder %v535, 16384
        %vm544 = vcmp.lt.s32.totalorder %v536, 16384
        %vm545 = vcmp.lt.s32.totalorder %v537, 16384
        %vm546 = vcmp.lt.s32.totalorder %v538, 16384
        %vm547 = vcmp.lt.s32.totalorder %v539, 16384
        %v548 = vsel %vm540, %v495, 0.0
        %v549 = vsel %vm541, %v496, 0.0
        %v550 = vsel %vm542, %v497, 0.0
        %v551 = vsel %vm543, %v498, 0.0
        %v552 = vsel %vm544, %v499, 0.0
        %v553 = vsel %vm545, %v500, 0.0
        %v554 = vsel %vm546, %v501, 0.0
        %v555 = vsel %vm547, %v502, 0.0
        %v556 = vadd.f32 %v548, %v549
        %v557 = vadd.f32 %v556, %v550
        %v558 = vadd.f32 %v557, %v551
        %v559 = vadd.f32 %v558, %v552
        %v560 = vadd.f32 %v559, %v553
        %v561 = vadd.f32 %v560, %v554
        %v562 = vadd.f32 %v561, %v555
        %v563 = vld [vmem:[%s393] sm:$0xff]
        %v564 = vadd.f32 %v563, %v562
        %565 = vst [vmem:[%s393] sm:$0xff] %v564
        %s566 = sand.u32 %s184, 1
        %s567 = scalar_lea.sflag [#allocation4], %s566
        %s568 = sand.u32 %s184, 1
        %s569 = smul.addr %s568, 8
        %s570 = scalar_lea.vmem [#allocation10], %s569
        // Predicated region
        $region57: #{tpu_custom_call.1} parent=35 // pred_check
          %p571 = pneg %p194
        $region58: #{tpu_custom_call.1} parent=35 // pred_check_branch
          %573 = sbr.rel (%p571) target = $region60
        $region59: #{tpu_custom_call.1} parent=35 // pred_region
          %s575 = ssub.s32 128, 128
          %576 = vsyncadd %s567, %s575
          %s577 = sadd.s32 %s33, %s32
          %s578 = smul.addr %s577, 128
          %s579 = scalar_lea.hbm %s4, %s578
          %s581 = sshll.u32 %s570, 4
          %s582 = int_to_ptr.vmem [resolvable:$true] %s581
          %584 = dma.vmem_to_hbm [thread:$0]  %s582, 128, %s579, %s567
        $region60: #{tpu_custom_call.1} parent=35 // pred_fallthru
          _
      $region36: #{tpu_custom_call.1} parent=5 // pred_fallthru
        _
      %p585 = scmp.le.s32.totalorder 2, %s22
      // Predicated region
      $region61: #{tpu_custom_call.1} parent=5 // pred_check
        %p586 = pneg %p585
      $region62: #{tpu_custom_call.1} parent=5 // pred_check_branch
        %588 = sbr.rel (%p586) target = $region64
      $region63: #{tpu_custom_call.1} parent=5 // pred_region
        %s589 = ssub.s32 %s22, 2
        // Predicated region
        $region65: #{tpu_custom_call.1} parent=63 // pred_check
          %p590 = pneg %p200
        $region66: #{tpu_custom_call.1} parent=63 // pred_check_branch
          %592 = sbr.rel (%p590) target = $region68
        $region67: #{tpu_custom_call.1} parent=63 // pred_region
          %s593 = sand.u32 %s185, 1
          %s594 = scalar_lea.sflag [#allocation4], %s593
          %s595 = sand.u32 %s185, 1
          %s596 = smul.addr %s595, 8
          %s597 = scalar_lea.vmem [#allocation10], %s596
          %598 = dma.done %s594, 128
        $region68: #{tpu_custom_call.1} parent=63 // pred_fallthru
          _
      $region64: #{tpu_custom_call.1} parent=5 // pred_fallthru
        _
    $region6: #{tpu_custom_call.1} parent=1 // loop_footer
      %s26 = sadd.s32 1, %s22
    $region7: #{tpu_custom_call.1} parent=1 // loop_footer_branch
      %21 = sbr.rel target = $region3
    $region8: #{tpu_custom_call.1} parent=1 // loop_exit
      _
    %599 = vsyncpa [#allocation3], 1
    %s600 = scalar_lea.sflag [#allocation3], 1
    %601 = vsyncpa %s600, 1
    %602 = vsyncpa [#allocation6], 1
    %s603 = scalar_lea.sflag [#allocation6], 1
    %604 = vsyncpa %s603, 1
    %605 = vsyncpa [#allocation9], 1
    %s606 = scalar_lea.sflag [#allocation9], 1
    %607 = vsyncpa %s606, 1
    %608 = vsyncpa [#allocation4], 1
    %s609 = scalar_lea.sflag [#allocation4], 1
    %610 = vsyncpa %s609, 1

</llo_original>
